<compile_context>
chip_gen: v7x
topology: tpu7x:2x2x1
jax: 0.10.0
libtpu: 0.0.40
codegen_flags: <defaults>
</compile_context>

<pallas_src>
import functools

import jax
import jax.numpy as jnp
from jax import lax
from jax.experimental import pallas as pl
from jax.experimental.pallas import tpu as pltpu


# ---------------------------------------------------------------------------
# "Rows" path: block = (n_tile, C, HW) — one or more whole images per step.
# ---------------------------------------------------------------------------
def _pool_rows_kernel(x_ref, o_ref, *, slab):
    nt, c, hw = x_ref.shape
    acc = jnp.zeros((nt, c), jnp.float32)
    # Static slab loop bounds the f32 temporary (matters for bf16 inputs).
    for s0 in range(0, hw, slab):
        s1 = min(hw, s0 + slab)
        acc = acc + jnp.sum(x_ref[:, :, s0:s1].astype(jnp.float32), axis=-1)
    o_ref[...] = acc.reshape(o_ref.shape)


# ---------------------------------------------------------------------------
# Chunked streaming path: grid = (n_split, N, chunks_per_split).
# Accumulate 128-lane slices into a narrow (1, C, 128) f32 scratch; finalize
# (single cross-lane reduce) on the last chunk of each (split, n).
# ---------------------------------------------------------------------------
def _pool_chunked_kernel(x_ref, o_ref, acc_ref, *, hw, hw_tile,
                         chunks_per_split, need_mask, unroll):
    p = pl.program_id(0)
    s = pl.program_id(2)
    g = p * chunks_per_split + s            # global chunk index (unclamped)
    n_slices = hw_tile // 128

    @pl.when(s == 0)
    def _init():
        acc_ref[...] = jnp.zeros_like(acc_ref)

    def _add_full(k, carry):
        off = pl.multiple_of(k * 128, 128)
        acc_ref[...] += x_ref[:, :, pl.ds(off, 128)].astype(jnp.float32)
        return carry

    if not need_mask:
        # H*W covered exactly by n_split*chunks_per_split*hw_tile: no masking.
        lax.fori_loop(0, n_slices, _add_full, 0, unroll=unroll)
    else:
        valid = hw - g * hw_tile            # real lanes in this chunk (<=0 for phantom)

        @pl.when(valid >= hw_tile)
        def _full_chunk():
            lax.fori_loop(0, n_slices, _add_full, 0, unroll=unroll)

        @pl.when(valid < hw_tile)
        def _ragged_chunk():
            lane = lax.broadcasted_iota(jnp.int32, acc_ref.shape, 2)

            def _add_masked(k, carry):
                off = pl.multiple_of(k * 128, 128)
                xk = x_ref[:, :, pl.ds(off, 128)].astype(jnp.float32)
                acc_ref[...] += jnp.where(lane + off < valid, xk, 0.0)
                return carry

            lax.fori_loop(0, n_slices, _add_masked, 0, unroll=unroll)

    @pl.when(s == chunks_per_split - 1)
    def _finalize():
        o_ref[...] = jnp.sum(acc_ref[...], axis=-1).reshape(o_ref.shape)


# ---------------------------------------------------------------------------
# Tiling helpers.
# ---------------------------------------------------------------------------
def _pick_hw_tile(C, HW, itemsize, target_bytes):
    """Largest multiple of 128 lanes so one (1, C, tile) block is ~target_bytes."""
    lanes = target_bytes // max(1, C * itemsize)
    lanes = (lanes // 128) * 128
    return max(128, lanes)


def _vmem_limit_bytes(block_bytes):
    # 2x block (double-buffered input) + accumulator/output/temps margin.
    # Capped at 48 MiB: below v7x's 64 MiB physical VMEM, above v5e's 16 MiB
    # scoped default.
    return int(min(48 << 20, max(16 << 20, 2 * block_bytes + (6 << 20))))


def _adaptive_avg_pool_sums(x_flat, *, block_target_bytes, hw_tile=None):
    """x_flat: (N, C, HW).  Returns f32 (N, C) sums over the HW axis."""
    N, C, HW = x_flat.shape
    itemsize = x_flat.dtype.itemsize
    row_bytes = C * HW * itemsize

    if hw_tile is None:
        hw_tile = HW if row_bytes <= block_target_bytes else _pick_hw_tile(
            C, HW, itemsize, block_target_bytes)
    else:
        hw_tile = min(int(hw_tile), HW)
        if hw_tile < HW:
            hw_tile = max(128, (hw_tile // 128) * 128)

    if hw_tile >= HW:
        # ---- rows path: whole image(s) per block, all-parallel grid over N ----
        n_tile = int(max(1, min(N, block_target_bytes // max(1, row_bytes))))
        block_bytes = n_tile * row_bytes
        slab = max(128, ((2 << 20) // max(1, n_tile * C * 4)) // 128 * 128)
        out = pl.pallas_call(
            functools.partial(_pool_rows_kernel, slab=slab),
            out_shape=jax.ShapeDtypeStruct((N, 1, C), jnp.float32),
            grid_spec=pltpu.PrefetchScalarGridSpec(
                num_scalar_prefetch=0,
                grid=(pl.cdiv(N, n_tile),),
                in_specs=[pl.BlockSpec((n_tile, C, HW), lambda i: (i, 0, 0))],
                out_specs=pl.BlockSpec((n_tile, 1, C), lambda i: (i, 0, 0)),
            ),
            compiler_params=pltpu.CompilerParams(
                dimension_semantics=("parallel",),
                vmem_limit_bytes=_vmem_limit_bytes(block_bytes)),
        )(x_flat)
        return out.reshape(N, C)

    # ---- chunked streaming path ----
    n_chunks = pl.cdiv(HW, hw_tile)
    # When N == 1, split the chunk range across a leading parallel axis so both
    # TensorCores (v7x megacore) stream HBM; otherwise the N axis provides it.
    n_split = 2 if (N == 1 and n_chunks >= 2) else 1
    chunks_per_split = pl.cdiv(n_chunks, n_split)
    need_mask = (n_split * chunks_per_split * hw_tile != HW)
    block_bytes = C * hw_tile * itemsize
    unroll = int(max(1, min(8, hw_tile // 128)))

    kernel = functools.partial(
        _pool_chunked_kernel, hw=HW, hw_tile=hw_tile,
        chunks_per_split=chunks_per_split, need_mask=need_mask, unroll=unroll)

    if n_split == 1:
        x_index = lambda p, n, s: (n, 0, s)
    else:
        # Clamp phantom chunk indices (fully masked in-kernel) into range.
        def x_index(p, n, s):
            return (n, 0, jnp.minimum(p * chunks_per_split + s, n_chunks - 1))

    out = pl.pallas_call(
        kernel,
        out_shape=jax.ShapeDtypeStruct((n_split, N, 1, C), jnp.float32),
        grid_spec=pltpu.PrefetchScalarGridSpec(
            num_scalar_prefetch=0,
            grid=(n_split, N, chunks_per_split),
            in_specs=[pl.BlockSpec((1, C, hw_tile), x_index)],
            out_specs=pl.BlockSpec((1, 1, 1, C), lambda p, n, s: (p, n, 0, 0)),
            scratch_shapes=[pltpu.VMEM((1, C, 128), jnp.float32)],
        ),
        compiler_params=pltpu.CompilerParams(
            dimension_semantics=("parallel", "parallel", "arbitrary"),
            vmem_limit_bytes=_vmem_limit_bytes(block_bytes)),
    )(x_flat)
    return out.sum(axis=0).reshape(N, C)


# ---------------------------------------------------------------------------
# Public entry point (matches CALayer1.forward).
# ---------------------------------------------------------------------------
def ca_layer1(x, w1, b1, w2, b2, *, block_target_bytes=8 << 20, hw_tile=None):
    """x: (N, C, H, W). Returns (N, C, 1, 1), matching the PyTorch module."""
    N, C, H, W = x.shape
    Cr = w1.shape[0]
    assert w1.shape == (Cr, C) and b1.shape == (Cr,)
    assert w2.shape == (C, Cr) and b2.shape == (C,)
    HW = H * W

    x_flat = x.reshape(N, C, HW)
    sums = _adaptive_avg_pool_sums(
        x_flat, block_target_bytes=block_target_bytes, hw_tile=hw_tile)
    pooled = sums * (1.0 / float(HW))                          # (N, C) f32

    # Tiny 1x1-conv epilogue (M<=N matmuls) stays in XLA, batched over N.
    h = jnp.maximum(pooled @ w1.astype(jnp.float32).T + b1.astype(jnp.float32), 0.0)
    y = jax.nn.sigmoid(h @ w2.astype(jnp.float32).T + b2.astype(jnp.float32))
    return y.astype(x.dtype).reshape(N, C, 1, 1)


def _reference(x, w1, b1, w2, b2):
    pooled = jnp.mean(x.astype(jnp.float32), axis=(2, 3))      # (N, C)
    h = jnp.maximum(pooled @ w1.T + b1, 0.0)                   # (N, Cr)
    y = jax.nn.sigmoid(h @ w2.T + b2)                          # (N, C)
    return y.astype(x.dtype).reshape(x.shape[0], x.shape[1], 1, 1)


if __name__ == "__main__":
    key = jax.random.PRNGKey(0)

    def run_case(N, C, H, W, case_key, **kwargs):
        Cr = C // 8
        kx, k1, k2, k3, k4 = jax.random.split(case_key, 5)
        x = jax.random.normal(kx, (N, C, H, W), dtype=jnp.float32)
        # Conv2d weight shapes (out, in, 1, 1) collapsed to (out, in).
        w1 = jax.random.normal(k1, (Cr, C), dtype=jnp.float32) * 0.1
        b1 = jax.random.normal(k2, (Cr,), dtype=jnp.float32) * 0.1
        w2 = jax.random.normal(k3, (C, Cr), dtype=jnp.float32) * 0.1
        b2 = jax.random.normal(k4, (C,), dtype=jnp.float32) * 0.1

        y = ca_layer1(x, w1, b1, w2, b2, **kwargs)
        jax.block_until_ready(y)

        y_ref = _reference(x, w1, b1, w2, b2)
        assert y.shape == (N, C, 1, 1)
        assert jnp.allclose(y, y_ref, atol=2e-5, rtol=2e-5), "mismatch vs reference"

    keys = jax.random.split(key, 4)
    # 1) Small input -> rows path, single block (grid=(1,)).
    run_case(2, 32, 16, 16, keys[0])
    # 2) Rows path with a multi-step parallel grid over N (small block target).
    run_case(4, 32, 16, 16, keys[1], block_target_bytes=64 * 1024)
    # 3) Chunked streaming path with a ragged last chunk; N axis parallel.
    run_case(2, 32, 96, 96, keys[2], block_target_bytes=512 * 1024)
    # 4) Chunked path with N == 1: 2-way split axis (v7x megacore), ragged and
    #    phantom chunks exercised.
    run_case(1, 32, 100, 100, keys[3], block_target_bytes=512 * 1024)

    print("KERNEL_OK")
</pallas_src>

<mosaic_0001>
module attributes {stable_mosaic.version = 11 : i64} {
  func.func @_pool_rows_kernel(%arg0: i32, %arg1: memref<2x32x256xf32, #tpu.memory_space<vmem>>, %arg2: memref<2x1x32xf32, #tpu.memory_space<vmem>>) attributes {dimension_semantics = [#tpu.dimension_semantics<parallel>], iteration_bounds = array<i64: 1>, scalar_prefetch = 0 : i64, scratch_operands = 0 : i64, tpu.core_type = #tpu.core_type<tc>, window_params = [{transform_indices = @transform_0, window_bounds = array<i64: 2, 32, 256>}, {transform_indices = @transform_1, window_bounds = array<i64: 2, 1, 32>}]} {
    %cst = arith.constant 0.000000e+00 : f32
    %0 = vector.broadcast %cst : f32 to vector<2x32xf32>
    %c0 = arith.constant 0 : index
    %c0_0 = arith.constant 0 : index
    %c0_1 = arith.constant 0 : index
    %1 = vector.load %arg1[%c0, %c0_0, %c0_1] : memref<2x32x256xf32, #tpu.memory_space<vmem>>, vector<2x32x256xf32>
    %cst_2 = arith.constant dense<0.000000e+00> : vector<2x32xf32>
    %2 = vector.multi_reduction <add>, %1, %cst_2 [2] : vector<2x32x256xf32> to vector<2x32xf32>
    %3 = arith.addf %0, %2 : vector<2x32xf32>
    %4 = vector.shape_cast %3 : vector<2x32xf32> to vector<2x1x32xf32>
    %c0_3 = arith.constant 0 : index
    %c0_4 = arith.constant 0 : index
    %c0_5 = arith.constant 0 : index
    %5 = vector.load %arg2[%c0_3, %c0_4, %c0_5] : memref<2x1x32xf32, #tpu.memory_space<vmem>>, vector<2x1x32xf32>
    tpu.vector_store %arg2[%c0_3, %c0_4, %c0_5], %4 {strides = array<i32>} : memref<2x1x32xf32, #tpu.memory_space<vmem>>, vector<2x1x32xf32>,
    return
  }
  func.func @transform_0(%arg0: i32) -> (i32, i32, i32) {
    %c0_i32 = arith.constant 0 : i32
    %c0_i32_0 = arith.constant 0 : i32
    %c0_i32_1 = arith.constant 0 : i32
    return %arg0, %c0_i32, %c0_i32_0 : i32, i32, i32
  }
  func.func @transform_1(%arg0: i32) -> (i32, i32, i32) {
    %c0_i32 = arith.constant 0 : i32
    %c0_i32_0 = arith.constant 0 : i32
    %c0_i32_1 = arith.constant 0 : i32
    return %arg0, %c0_i32, %c0_i32_0 : i32, i32, i32
  }
}

</mosaic_0001>

<llo_original>
// kernel: tpu_custom_call.1
$region0: #{tpu_custom_call.1}
  #allocation0 [shape = 'u32[]', space=smem, size = 0x4, offset = 0x4, fixed_abs, tag = 'smem constant byte address 0x4 - core index']
  #allocation1 [shape = 'u32[144,128]{1,0:T(1,128)}', space=vmem, size = 0x12000, scoped, tag = 'internal scratch']
  %s0 = inlined_call_operand.hbm [shape: f32[2,32,256], index: 0, kind: input, shape index: {}]
  %s1 = inlined_call_operand.hbm [shape: f32[2,1,32], index: 1, kind: output, shape index: {}]
  %s2 = sld [smem:[#allocation0]]
  $region18: #{tpu_custom_call.1} parent=0
    _
  %s4 = ssub.s32 1, %s2
  %s5 = scalar_select 0, %s4, %s2
  $region1: #{tpu_custom_call.1} parent=0
    #allocation2 [shape = 'u8[65536]{0}', space=vmem, size = 0x10000, scoped, tag = 'input window, operand 0, single buffered']
    #allocation3 [shape = 's32[1]{0}', space=sflag, size = 0x4, scoped, tag = 'scoped memory for tpu_custom_call.1']
    #allocation4 [shape = 's32[1]{0}', space=sflag, size = 0x4, scoped, tag = 'scoped memory for tpu_custom_call.1']
    #allocation5 [shape = 'u8[1024]{0}', space=vmem, size = 0x400, scoped, tag = 'output window, operand 0, single buffered']
    %6 = vsyncpa [#allocation3], 0
    %7 = vsyncpa [#allocation4], 0
    // Predicated region
    $region2: #{tpu_custom_call.1} parent=1 // pred_check
      _
    $region3: #{tpu_custom_call.1} parent=1 // pred_check_branch
      %9 = sbr.rel (0) target = $region5
    $region4: #{tpu_custom_call.1} parent=1 // pred_region
      %s11 = ssub.s32 2048, 2048
      %12 = vsyncadd [#allocation3], %s11
      %s13 = sshll.u32 [#allocation2], 4
      %s14 = int_to_ptr.vmem [resolvable:$true] %s13
      %19 = dma.hbm_to_vmem [thread:$0]  %s0, 2048, %s14, [#allocation3], 256, 256, 16
    $region5: #{tpu_custom_call.1} parent=1 // pred_fallthru
      _
    // Predicated region
    $region6: #{tpu_custom_call.1} parent=1 // pred_check
      _
    $region7: #{tpu_custom_call.1} parent=1 // pred_check_branch
      %21 = sbr.rel (0) target = $region9
    $region8: #{tpu_custom_call.1} parent=1 // pred_region
      %22 = dma.done [#allocation3], 2048
    $region9: #{tpu_custom_call.1} parent=1 // pred_fallthru
      _
    %v23 = vld [vmem:[#allocation2] sm:$0xff]
    %v24 = vld [vmem:[#allocation2 + $0x8] sm:$0xff]
    %v25 = vld [vmem:[#allocation2 + $0x10] sm:$0xff]
    %v26 = vld [vmem:[#allocation2 + $0x18] sm:$0xff]
    %v27 = vld [vmem:[#allocation2 + $0x20] sm:$0xff]
    %v28 = vld [vmem:[#allocation2 + $0x28] sm:$0xff]
    %v29 = vld [vmem:[#allocation2 + $0x30] sm:$0xff]
    %v30 = vld [vmem:[#allocation2 + $0x38] sm:$0xff]
    %v31 = vld [vmem:[#allocation2 + $0x40] sm:$0xff]
    %v32 = vld [vmem:[#allocation2 + $0x48] sm:$0xff]
    %v33 = vld [vmem:[#allocation2 + $0x50] sm:$0xff]
    %v34 = vld [vmem:[#allocation2 + $0x58] sm:$0xff]
    %v35 = vld [vmem:[#allocation2 + $0x60] sm:$0xff]
    %v36 = vld [vmem:[#allocation2 + $0x68] sm:$0xff]
    %v37 = vld [vmem:[#allocation2 + $0x70] sm:$0xff]
    %v38 = vld [vmem:[#allocation2 + $0x78] sm:$0xff]
    %v39 = vadd.f32 %v23, %v24
    %40 = vadd.xlane.f32.xlu0 %v39
    %v41 = vpop.xlane.xlu0 %40
    %v42 = vadd.f32 %v25, %v26
    %43 = vadd.xlane.f32.xlu0 %v42
    %v44 = vpop.xlane.xlu0 %43
    %v45 = vadd.f32 %v27, %v28
    %46 = vadd.xlane.f32.xlu0 %v45
    %v47 = vpop.xlane.xlu0 %46
    %v48 = vadd.f32 %v29, %v30
    %49 = vadd.xlane.f32.xlu0 %v48
    %v50 = vpop.xlane.xlu0 %49
    %v51 = vadd.f32 %v31, %v32
    %52 = vadd.xlane.f32.xlu0 %v51
    %v53 = vpop.xlane.xlu0 %52
    %v54 = vadd.f32 %v33, %v34
    %55 = vadd.xlane.f32.xlu0 %v54
    %v56 = vpop.xlane.xlu0 %55
    %v57 = vadd.f32 %v35, %v36
    %58 = vadd.xlane.f32.xlu0 %v57
    %v59 = vpop.xlane.xlu0 %58
    %v60 = vadd.f32 %v37, %v38
    %61 = vadd.xlane.f32.xlu0 %v60
    %v62 = vpop.xlane.xlu0 %61
    %v63 = vadd.f32 %v41, 0.0
    %v64 = vadd.f32 %v44, 0.0
    %v65 = vadd.f32 %v47, 0.0
    %v66 = vadd.f32 %v50, 0.0
    %v67 = vadd.f32 %v53, 0.0
    %v68 = vadd.f32 %v56, 0.0
    %v69 = vadd.f32 %v59, 0.0
    %v70 = vadd.f32 %v62, 0.0
    %v79 = vlaneseq
    %v80 = vand.u32 %v79, 127
    %v81 = vlaneseq
    %v82 = vshrl.u32 %v81, 7
    %v83 = vsub.s32 %v80, %v82
    %v84 = vrot.slane %v63, %v83
    %v85 = vadd.s32 %v80, 4294967288
    %v86 = vlaneseq
    %v87 = vshrl.u32 %v86, 7
    %v88 = vsub.s32 %v85, %v87
    %v89 = vrot.slane %v64, %v88
    %vm90 = vcmask 130112
    %v91 = vsel %vm90, %v89, %v84
    %v92 = vadd.s32 %v80, 4294967280
    %v93 = vlaneseq
    %v94 = vshrl.u32 %v93, 7
    %v95 = vsub.s32 %v92, %v94
    %v96 = vrot.slane %v65, %v95
    %vm97 = vcmask 195712
    %v98 = vsel %vm97, %v96, %v91
    %v99 = vadd.s32 %v80, 4294967272
    %v100 = vlaneseq
    %v101 = vshrl.u32 %v100, 7
    %v102 = vsub.s32 %v99, %v101
    %v103 = vrot.slane %v66, %v102
    %vm104 = vcmask 261312
    %v105 = vsel %vm104, %v103, %v98
    %v106 = vlaneseq
    %v107 = vshrl.u32 %v106, 7
    %v108 = vsub.s32 %v80, %v107
    %v109 = vrot.slane %v67, %v108
    %v110 = vlaneseq
    %v111 = vshrl.u32 %v110, 7
    %v112 = vsub.s32 %v85, %v111
    %v113 = vrot.slane %v68, %v112
    %v114 = vsel %vm90, %v113, %v109
    %v115 = vlaneseq
    %v116 = vshrl.u32 %v115, 7
    %v117 = vsub.s32 %v92, %v116
    %v118 = vrot.slane %v69, %v117
    %v119 = vsel %vm97, %v118, %v114
    %v120 = vlaneseq
    %v121 = vshrl.u32 %v120, 7
    %v122 = vsub.s32 %v99, %v121
    %v123 = vrot.slane %v70, %v122
    %v124 = vsel %vm104, %v123, %v119
    %vm127 = vcmask 253952
    %128 = vst.msk [vmem:[#allocation5] sm:$0x1] %vm127, %v105
    %129 = vst.msk [vmem:[#allocation5 + $0x1] sm:$0x1] %vm127, %v124
    // Predicated region
    $region10: #{tpu_custom_call.1} parent=1 // pred_check
      _
    $region11: #{tpu_custom_call.1} parent=1 // pred_check_branch
      %131 = sbr.rel (0) target = $region13
    $region12: #{tpu_custom_call.1} parent=1 // pred_region
      %s133 = ssub.s32 32, 32
      %134 = vsyncadd [#allocation4], %s133
      %s135 = sshll.u32 [#allocation5], 4
      %s136 = int_to_ptr.vmem [resolvable:$true] %s135
      %141 = dma.vmem_to_hbm [thread:$0]  %s136, 32, %s1, [#allocation4], 16, 16, 1
    $region13: #{tpu_custom_call.1} parent=1 // pred_fallthru
      _
    // Predicated region
    $region14: #{tpu_custom_call.1} parent=1 // pred_check
      _
    $region15: #{tpu_custom_call.1} parent=1 // pred_check_branch
      %143 = sbr.rel (0) target = $region17
    $region16: #{tpu_custom_call.1} parent=1 // pred_region
      %144 = dma.done [#allocation4], 32
    $region17: #{tpu_custom_call.1} parent=1 // pred_fallthru
      _
    %145 = vsyncpa [#allocation3], 1
    %146 = vsyncpa [#allocation4], 1

</llo_original>
